<compile_context>
chip_gen: v7x
topology: tpu7x:2x2x1
jax: 0.10.0
libtpu: 0.0.40
codegen_flags: <defaults>
</compile_context>

<pallas_src>
import functools
import math

import jax
import jax.numpy as jnp
from jax.experimental import pallas as pl
from jax.experimental.pallas import tpu as pltpu

INV_SQRT2 = 1.0 / math.sqrt(2.0)
LANES = 128


# ----------------------------------------------------------------------------
# Pass 1: per-split partial sum of squares of y = x * fading * fading_scale
# grid = (n_split, n_inner); outer 'parallel' (megacore), inner 'arbitrary'.
# ----------------------------------------------------------------------------
def _power_kernel(*refs, fading_scale, use_fading):
    if use_fading:
        x_ref, f_ref, part_ref, acc_ref = refs
    else:
        x_ref, part_ref, acc_ref = refs

    i = pl.program_id(1)

    @pl.when(i == 0)
    def _():
        acc_ref[...] = jnp.zeros_like(acc_ref)

    y = x_ref[...].astype(jnp.float32)
    if use_fading:
        y = y * (f_ref[...].astype(jnp.float32) * fading_scale)
    acc_ref[...] += jnp.sum(y * y, axis=0, keepdims=True)

    @pl.when(i == pl.num_programs(1) - 1)
    def _():
        part_ref[...] = jnp.sum(acc_ref[...], axis=1, keepdims=True)


# ----------------------------------------------------------------------------
# Pass 2: out = x * fading * fading_scale + awgn * noise_scale   (elementwise)
# noise_scale arrives as a (1,) f32 array resident in SMEM.
# ----------------------------------------------------------------------------
def _apply_kernel(*refs, fading_scale, use_fading):
    if use_fading:
        scale_ref, x_ref, f_ref, n_ref, o_ref = refs
    else:
        scale_ref, x_ref, n_ref, o_ref = refs

    noise_scale = scale_ref[0]
    y = x_ref[...].astype(jnp.float32)
    if use_fading:
        y = y * (f_ref[...].astype(jnp.float32) * fading_scale)
    o_ref[...] = (y + n_ref[...].astype(jnp.float32) * noise_scale).astype(o_ref.dtype)


def channel_model(x, fading, awgn, *, mode="rayleigh", snr_db=25.0, tile_rows=1024):
    """Pallas implementation of ChannelModel.forward.

    x, fading, awgn: same shape (NCHW).  fading/awgn are standard-normal draws
    supplied by the caller (deterministic, checkable).  `fading` is ignored in
    'awgn' mode and never streamed through the kernels.
    """
    if mode not in ("awgn", "rayleigh"):
        return x  # identity branch of the module

    use_fading = mode == "rayleigh"
    fading_scale = INV_SQRT2 if use_fading else 1.0

    orig_shape = x.shape
    out_dtype = x.dtype
    total = int(x.size)

    # ---- layout: flatten -> pad -> (rows_pad, 128) slab --------------------
    rows = pl.cdiv(total, LANES)
    eff_tile = max(8, min(int(tile_rows), ((rows + 7) // 8) * 8))
    eff_tile = ((eff_tile + 7) // 8) * 8          # keep a multiple of 8 sublanes

    n_tiles = pl.cdiv(rows, eff_tile)
    n_split = 2 if n_tiles >= 2 else 1            # engage both TCs on v7x in pass 1
    n_inner = pl.cdiv(n_tiles, n_split)
    n_tiles_pad = n_split * n_inner
    rows_pad = n_tiles_pad * eff_tile
    total_pad = rows_pad * LANES

    def to_slab(a):
        flat = a.reshape(-1)
        if total_pad != total:
            flat = jnp.pad(flat, (0, total_pad - total))   # zeros: no power contribution
        return flat.reshape(rows_pad, LANES)

    x2 = to_slab(x)
    n2 = to_slab(awgn)
    f2 = to_slab(fading) if use_fading else None

    # ---- pass 1: global signal power ---------------------------------------
    row_spec_p1 = pl.BlockSpec((eff_tile, LANES), lambda s, i: (s * n_inner + i, 0))
    part_spec = pl.BlockSpec((1, 1), lambda s, i: (s, 0))

    p1_in_specs = [row_spec_p1, row_spec_p1] if use_fading else [row_spec_p1]
    p1_inputs = (x2, f2) if use_fading else (x2,)

    partials = pl.pallas_call(
        functools.partial(_power_kernel, fading_scale=fading_scale,
                          use_fading=use_fading),
        out_shape=jax.ShapeDtypeStruct((n_split, 1), jnp.float32),
        grid_spec=pltpu.PrefetchScalarGridSpec(
            num_scalar_prefetch=0,
            grid=(n_split, n_inner),
            in_specs=p1_in_specs,
            out_specs=part_spec,
            scratch_shapes=[pltpu.VMEM((1, LANES), jnp.float32)],
        ),
        compiler_params=pltpu.CompilerParams(
            dimension_semantics=("parallel", "arbitrary")),
    )(*p1_inputs)

    power = jnp.sum(partials) / jnp.float32(total)
    snr = 10.0 ** (float(snr_db) / 10.0)
    noise_scale = jnp.sqrt(power / jnp.float32(snr)).astype(jnp.float32).reshape(1)

    # ---- pass 2: apply fading + scaled AWGN ---------------------------------
    row_spec = pl.BlockSpec((eff_tile, LANES), lambda i: (i, 0))
    smem_spec = pl.BlockSpec(memory_space=pltpu.MemorySpace.SMEM)

    p2_in_specs = [smem_spec, row_spec] + ([row_spec] if use_fading else []) + [row_spec]
    p2_inputs = (noise_scale, x2) + ((f2,) if use_fading else ()) + (n2,)

    out2 = pl.pallas_call(
        functools.partial(_apply_kernel, fading_scale=fading_scale,
                          use_fading=use_fading),
        out_shape=jax.ShapeDtypeStruct((rows_pad, LANES), out_dtype),
        grid_spec=pltpu.PrefetchScalarGridSpec(
            num_scalar_prefetch=0,
            grid=(n_tiles_pad,),
            in_specs=p2_in_specs,
            out_specs=row_spec,
        ),
        compiler_params=pltpu.CompilerParams(dimension_semantics=("parallel",)),
    )(*p2_inputs)

    out_flat = out2.reshape(-1)
    if total_pad != total:
        out_flat = out_flat[:total]
    return out_flat.reshape(orig_shape)


def channel_model_ref(x, fading, awgn, *, mode="rayleigh", snr_db=25.0):
    """Pure-JAX reference with identical semantics."""
    if mode not in ("awgn", "rayleigh"):
        return x
    y = x if mode == "awgn" else x * fading * INV_SQRT2
    power = jnp.mean(y * y)
    snr = 10.0 ** (snr_db / 10.0)
    return y + awgn * jnp.sqrt(power / snr)


if __name__ == "__main__":
    key = jax.random.PRNGKey(0)
    k_x, k_f, k_n = jax.random.split(key, 3)

    # NCHW input: batch=2, channels=4, spatial=16x16
    shape = (2, 4, 16, 16)
    x = jax.random.normal(k_x, shape, dtype=jnp.float32)
    fading = jax.random.normal(k_f, shape, dtype=jnp.float32)
    awgn = jax.random.normal(k_n, shape, dtype=jnp.float32)

    ref = channel_model_ref(x, fading, awgn, mode="rayleigh", snr_db=25.0)

    # 1) rayleigh, default large-tile (single-tile here) path
    out = jax.block_until_ready(
        channel_model(x, fading, awgn, mode="rayleigh", snr_db=25.0))
    assert out.shape == shape and out.dtype == jnp.float32
    assert jnp.allclose(out, ref, atol=1e-5, rtol=1e-5)

    # 2) rayleigh, multi-tile + split-reduction path (forces 2 tiles of 8 rows)
    out_mt = jax.block_until_ready(
        channel_model(x, fading, awgn, mode="rayleigh", snr_db=25.0, tile_rows=8))
    assert jnp.allclose(out_mt, ref, atol=1e-5, rtol=1e-5)

    # 3) awgn mode (fading never streamed) on a padding-exercising shape
    shape2 = (2, 3, 5, 7)  # 210 elements -> padded internally to a full tile
    kx2, kn2 = jax.random.split(jax.random.PRNGKey(1))
    x_small = jax.random.normal(kx2, shape2, dtype=jnp.float32)
    n_small = jax.random.normal(kn2, shape2, dtype=jnp.float32)
    out_awgn = jax.block_until_ready(
        channel_model(x_small, x_small, n_small, mode="awgn", snr_db=25.0))
    ref_awgn = channel_model_ref(x_small, x_small, n_small, mode="awgn", snr_db=25.0)
    assert out_awgn.shape == shape2
    assert jnp.allclose(out_awgn, ref_awgn, atol=1e-5, rtol=1e-5)

    print("KERNEL_OK")
</pallas_src>

<mosaic_0001>
module attributes {stable_mosaic.version = 11 : i64} {
  func.func @_power_kernel(%arg0: i32, %arg1: i32, %arg2: memref<16x128xf32, #tpu.memory_space<vmem>>, %arg3: memref<16x128xf32, #tpu.memory_space<vmem>>, %arg4: memref<1x1xf32, #tpu.memory_space<vmem>>, %arg5: memref<1x128xf32, #tpu.memory_space<vmem>>) attributes {dimension_semantics = [#tpu.dimension_semantics<parallel>, #tpu.dimension_semantics<arbitrary>], iteration_bounds = array<i64: 1, 1>, scalar_prefetch = 0 : i64, scratch_operands = 1 : i64, tpu.core_type = #tpu.core_type<tc>, window_params = [{transform_indices = @transform_0, window_bounds = array<i64: 16, 128>}, {transform_indices = @transform_1, window_bounds = array<i64: 16, 128>}, {transform_indices = @transform_2, window_bounds = array<i64: 1, 1>}]} {
    %c0_i32 = arith.constant 0 : i32
    %0 = arith.cmpi eq, %arg1, %c0_i32 : i32
    %1 = arith.extui %0 : i1 to i32
    %c0_i32_0 = arith.constant 0 : i32
    %2 = arith.cmpi ne, %1, %c0_i32_0 : i32
    scf.if %2 {
      %cst_11 = arith.constant 0.000000e+00 : f32
      %17 = vector.broadcast %cst_11 : f32 to vector<1x128xf32>
      %c0_12 = arith.constant 0 : index
      %c0_13 = arith.constant 0 : index
      %18 = vector.load %arg5[%c0_12, %c0_13] : memref<1x128xf32, #tpu.memory_space<vmem>>, vector<1x128xf32>
      tpu.vector_store %arg5[%c0_12, %c0_13], %17 {strides = array<i32>} : memref<1x128xf32, #tpu.memory_space<vmem>>, vector<1x128xf32>,
    } else {
    }
    %c0 = arith.constant 0 : index
    %c0_1 = arith.constant 0 : index
    %3 = vector.load %arg2[%c0, %c0_1] : memref<16x128xf32, #tpu.memory_space<vmem>>, vector<16x128xf32>
    %c0_2 = arith.constant 0 : index
    %c0_3 = arith.constant 0 : index
    %4 = vector.load %arg3[%c0_2, %c0_3] : memref<16x128xf32, #tpu.memory_space<vmem>>, vector<16x128xf32>
    %cst = arith.constant 0.707106769 : f32
    %5 = vector.broadcast %cst : f32 to vector<16x128xf32>
    %6 = arith.mulf %4, %5 : vector<16x128xf32>
    %7 = arith.mulf %3, %6 : vector<16x128xf32>
    %c0_4 = arith.constant 0 : index
    %c0_5 = arith.constant 0 : index
    %8 = vector.load %arg5[%c0_4, %c0_5] : memref<1x128xf32, #tpu.memory_space<vmem>>, vector<1x128xf32>
    %9 = arith.mulf %7, %7 : vector<16x128xf32>
    %cst_6 = arith.constant dense<0.000000e+00> : vector<128xf32>
    %10 = vector.multi_reduction <add>, %9, %cst_6 [0] : vector<16x128xf32> to vector<128xf32>
    %11 = vector.shape_cast %10 : vector<128xf32> to vector<1x128xf32>
    %12 = arith.addf %8, %11 : vector<1x128xf32>
    %c0_7 = arith.constant 0 : index
    %c0_8 = arith.constant 0 : index
    %13 = vector.load %arg5[%c0_7, %c0_8] : memref<1x128xf32, #tpu.memory_space<vmem>>, vector<1x128xf32>
    tpu.vector_store %arg5[%c0_7, %c0_8], %12 {strides = array<i32>} : memref<1x128xf32, #tpu.memory_space<vmem>>, vector<1x128xf32>,
    %c0_i32_9 = arith.constant 0 : i32
    %14 = arith.cmpi eq, %arg1, %c0_i32_9 : i32
    %15 = arith.extui %14 : i1 to i32
    %c0_i32_10 = arith.constant 0 : i32
    %16 = arith.cmpi ne, %15, %c0_i32_10 : i32
    scf.if %16 {
      %c0_11 = arith.constant 0 : index
      %c0_12 = arith.constant 0 : index
      %17 = vector.load %arg5[%c0_11, %c0_12] : memref<1x128xf32, #tpu.memory_space<vmem>>, vector<1x128xf32>
      %cst_13 = arith.constant dense<0.000000e+00> : vector<1xf32>
      %18 = vector.multi_reduction <add>, %17, %cst_13 [1] : vector<1x128xf32> to vector<1xf32>
      %19 = vector.shape_cast %18 : vector<1xf32> to vector<1x1xf32>
      %c0_14 = arith.constant 0 : index
      %c0_15 = arith.constant 0 : index
      %20 = vector.load %arg4[%c0_14, %c0_15] : memref<1x1xf32, #tpu.memory_space<vmem>>, vector<1x1xf32>
      tpu.vector_store %arg4[%c0_14, %c0_15], %19 {strides = array<i32>} : memref<1x1xf32, #tpu.memory_space<vmem>>, vector<1x1xf32>,
    } else {
    }
    return
  }
  func.func @transform_0(%arg0: i32, %arg1: i32) -> (i32, i32) {
    %c1_i32 = arith.constant 1 : i32
    %0 = arith.muli %arg0, %c1_i32 : i32
    %1 = arith.addi %0, %arg1 : i32
    %c0_i32 = arith.constant 0 : i32
    %c0_i32_0 = arith.constant 0 : i32
    return %1, %c0_i32 : i32, i32
  }
  func.func @transform_1(%arg0: i32, %arg1: i32) -> (i32, i32) {
    %c1_i32 = arith.constant 1 : i32
    %0 = arith.muli %arg0, %c1_i32 : i32
    %1 = arith.addi %0, %arg1 : i32
    %c0_i32 = arith.constant 0 : i32
    %c0_i32_0 = arith.constant 0 : i32
    return %1, %c0_i32 : i32, i32
  }
  func.func @transform_2(%arg0: i32, %arg1: i32) -> (i32, i32) {
    %c0_i32 = arith.constant 0 : i32
    %c0_i32_0 = arith.constant 0 : i32
    return %arg0, %c0_i32 : i32, i32
  }
}

</mosaic_0001>

<llo_original>
// kernel: tpu_custom_call.1
$region0: #{tpu_custom_call.1}
  #allocation0 [shape = 'u32[]', space=smem, size = 0x4, offset = 0x4, fixed_abs, tag = 'smem constant byte address 0x4 - core index']
  #allocation1 [shape = 'u32[144,128]{1,0:T(1,128)}', space=vmem, size = 0x12000, scoped, tag = 'internal scratch']
  #allocation2 [shape = 'f32[1,128]{1,0:T(1,128)}', space=vmem, size = 0x200, scoped, tag = 'scratch operand']
  %s0 = inlined_call_operand.hbm [shape: f32[16,128], index: 0, kind: input, shape index: {}]
  %s1 = inlined_call_operand.hbm [shape: f32[16,128], index: 1, kind: input, shape index: {}]
  %s2 = inlined_call_operand.hbm [shape: f32[1,1], index: 2, kind: output, shape index: {}]
  %s3 = sld [smem:[#allocation0]]
  $region34: #{tpu_custom_call.1} parent=0
    _
  %s5 = ssub.s32 1, %s3
  %s6 = scalar_select 0, %s5, %s3
  $region1: #{tpu_custom_call.1} parent=0
    #allocation3 [shape = 'u8[8192]{0}', space=vmem, size = 0x2000, scoped, tag = 'input window, operand 0, single buffered']
    #allocation4 [shape = 's32[1]{0}', space=sflag, size = 0x4, scoped, tag = 'scoped memory for tpu_custom_call.1']
    #allocation5 [shape = 's32[1]{0}', space=sflag, size = 0x4, scoped, tag = 'scoped memory for tpu_custom_call.1']
    #allocation6 [shape = 'u8[8192]{0}', space=vmem, size = 0x2000, scoped, tag = 'input window, operand 1, single buffered']
    #allocation7 [shape = 's32[1]{0}', space=sflag, size = 0x4, scoped, tag = 'scoped memory for tpu_custom_call.1']
    #allocation8 [shape = 'u8[512]{0}', space=vmem, size = 0x400, scoped, tag = 'output window, operand 0, single buffered']
    %7 = vsyncpa [#allocation4], 0
    %8 = vsyncpa [#allocation7], 0
    %9 = vsyncpa [#allocation5], 0
    // Predicated region
    $region2: #{tpu_custom_call.1} parent=1 // pred_check
      _
    $region3: #{tpu_custom_call.1} parent=1 // pred_check_branch
      %11 = sbr.rel (0) target = $region5
    $region4: #{tpu_custom_call.1} parent=1 // pred_region
      %s12 = sadd.s32 0, 0
      %s13 = smul.u32 2, %s12
      %s15 = ssub.s32 256, 256
      %16 = vsyncadd [#allocation4], %s15
      %s17 = smul.addr %s13, 128
      %s18 = scalar_lea.hbm %s0, %s17
      %s19 = sshll.u32 [#allocation3], 4
      %s20 = int_to_ptr.vmem [resolvable:$true] %s19
      %25 = dma.hbm_to_vmem [thread:$0]  %s18, 256, %s20, [#allocation4], 128, 128, 8
    $region5: #{tpu_custom_call.1} parent=1 // pred_fallthru
      _
    // Predicated region
    $region6: #{tpu_custom_call.1} parent=1 // pred_check
      _
    $region7: #{tpu_custom_call.1} parent=1 // pred_check_branch
      %27 = sbr.rel (0) target = $region9
    $region8: #{tpu_custom_call.1} parent=1 // pred_region
      %s28 = sadd.s32 0, 0
      %s29 = smul.u32 2, %s28
      %s31 = ssub.s32 256, 256
      %32 = vsyncadd [#allocation7], %s31
      %s33 = smul.addr %s29, 128
      %s34 = scalar_lea.hbm %s1, %s33
      %s35 = sshll.u32 [#allocation6], 4
      %s36 = int_to_ptr.vmem [resolvable:$true] %s35
      %41 = dma.hbm_to_vmem [thread:$0]  %s34, 256, %s36, [#allocation7], 128, 128, 8
    $region9: #{tpu_custom_call.1} parent=1 // pred_fallthru
      _
    // Predicated region
    $region10: #{tpu_custom_call.1} parent=1 // pred_check
      _
    $region11: #{tpu_custom_call.1} parent=1 // pred_check_branch
      %43 = sbr.rel (0) target = $region13
    $region12: #{tpu_custom_call.1} parent=1 // pred_region
      %44 = dma.done [#allocation4], 256
    $region13: #{tpu_custom_call.1} parent=1 // pred_fallthru
      _
    // Predicated region
    $region14: #{tpu_custom_call.1} parent=1 // pred_check
      _
    $region15: #{tpu_custom_call.1} parent=1 // pred_check_branch
      %46 = sbr.rel (0) target = $region17
    $region16: #{tpu_custom_call.1} parent=1 // pred_region
      %47 = dma.done [#allocation7], 256
    $region17: #{tpu_custom_call.1} parent=1 // pred_fallthru
      _
    %s48 = sadd.s32 0, 0
    %s49 = smul.u32 2, %s48
    %s50 = sadd.s32 0, 0
    %s51 = smul.u32 2, %s50
    %p52 = scmp.eq.s32.totalorder 0, 0
    // Predicated region
    $region18: #{tpu_custom_call.1} parent=1 // pred_check
      %p53 = pneg %p52
    $region19: #{tpu_custom_call.1} parent=1 // pred_check_branch
      %55 = sbr.rel (%p53) target = $region21
    $region20: #{tpu_custom_call.1} parent=1 // pred_region
      %56 = vst [vmem:[#allocation2] sm:$0x1] 0.0
    $region21: #{tpu_custom_call.1} parent=1 // pred_fallthru
      _
    %v57 = vld [vmem:[#allocation3] sm:$0xff]
    %v58 = vld [vmem:[#allocation3 + $0x8] sm:$0xff]
    %v59 = vld [vmem:[#allocation6] sm:$0xff]
    %v60 = vld [vmem:[#allocation6 + $0x8] sm:$0xff]
    %v61 = vmul.f32 %v59, 0.70710677
    %v62 = vmul.f32 %v60, 0.70710677
    %v63 = vmul.f32 %v57, %v61
    %v64 = vmul.f32 %v58, %v62
    %v65 = vld [vmem:[#allocation2] sm:$0x1]
    %v66 = vmul.f32 %v63, %v63
    %v67 = vmul.f32 %v64, %v64
    %v68 = vadd.f32 %v66, %v67
    %v69 = vrot.slane %v68, 4
    %v70 = vadd.f32 %v68, %v69
    %v71 = vrot.slane %v70, 2
    %v72 = vadd.f32 %v70, %v71
    %v73 = vrot.slane %v72, 1
    %v74 = vadd.f32 %v72, %v73
    %v75 = vadd.f32 %v65, %v74
    %76 = vst [vmem:[#allocation2] sm:$0x1] %v75
    // Predicated region
    $region22: #{tpu_custom_call.1} parent=1 // pred_check
      %p77 = pneg %p52
    $region23: #{tpu_custom_call.1} parent=1 // pred_check_branch
      %79 = sbr.rel (%p77) target = $region25
    $region24: #{tpu_custom_call.1} parent=1 // pred_region
      %v80 = vld [vmem:[#allocation2] sm:$0x1]
      %vm81 = vcmask 1040384
      %v82 = vsel %vm81, %v80, 0.0
      %83 = vadd.xlane.f32.xlu0 %v82
      %v84 = vpop.xlane.xlu0 %83
      %vm85 = vcmask 0
      %86 = vst.msk [vmem:[#allocation8] sm:$0x1] %vm85, %v84
    $region25: #{tpu_custom_call.1} parent=1 // pred_fallthru
      _
    // Predicated region
    $region26: #{tpu_custom_call.1} parent=1 // pred_check
      _
    $region27: #{tpu_custom_call.1} parent=1 // pred_check_branch
      %88 = sbr.rel (0) target = $region29
    $region28: #{tpu_custom_call.1} parent=1 // pred_region
      %s90 = ssub.s32 16, 16
      %91 = vsyncadd [#allocation5], %s90
      %s93 = sshll.u32 [#allocation8], 4
      %s94 = int_to_ptr.vmem [resolvable:$true] %s93
      %96 = dma.vmem_to_hbm [thread:$0]  %s94, 16, %s2, [#allocation5]
    $region29: #{tpu_custom_call.1} parent=1 // pred_fallthru
      _
    // Predicated region
    $region30: #{tpu_custom_call.1} parent=1 // pred_check
      _
    $region31: #{tpu_custom_call.1} parent=1 // pred_check_branch
      %98 = sbr.rel (0) target = $region33
    $region32: #{tpu_custom_call.1} parent=1 // pred_region
      %99 = dma.done [#allocation5], 16
    $region33: #{tpu_custom_call.1} parent=1 // pred_fallthru
      _
    %100 = vsyncpa [#allocation4], 1
    %101 = vsyncpa [#allocation7], 1
    %102 = vsyncpa [#allocation5], 1

</llo_original>
